<compile_context>
chip_gen: v5e
topology: v5e:2x2
jax: 0.10.0
libtpu: 0.0.40
codegen_flags: <defaults>
</compile_context>

<pallas_src>
import jax
import jax.numpy as jnp
from jax import lax
from jax.experimental import pallas as pl
from jax.experimental.pallas import tpu as pltpu


# ---- tiling constants -------------------------------------------------------
_LANE_ALIGN = 256        # tn/tk alignment: v6e/v7x MXU is 256 wide (ok on v5e too)
_SUBLANE_ALIGN = 8
_TN_MAX, _TK_MAX, _TM_MAX = 1024, 512, 512
_TN_CANDIDATES = (1024, 768, 512, 256)   # descending, multiples of 256
_TK_CANDIDATES = (512, 256)
_TM_CANDIDATES = (512, 256, 128, 64)


def _round_up(x: int, m: int) -> int:
    return ((x + m - 1) // m) * m


def _pick_tile(dim: int, align: int, max_tile: int, candidates) -> int:
    """Single block if the (aligned) dim fits under max_tile; otherwise pick the
    candidate tile minimizing padding waste (ties -> larger tile)."""
    padded = _round_up(dim, align)
    if padded <= max_tile:
        return padded
    best, best_waste = None, None
    for c in candidates:                      # descending
        waste = _round_up(dim, c) - dim
        if best is None or waste < best_waste:
            best, best_waste = c, waste
    return best


# ---- kernel -----------------------------------------------------------------
def _mlp_top_kernel(x_ref, w_ref, b_ref, o_ref):
    """One (tm, tn) output tile of y = x @ W^T + b.

    Grid = (M/tm, N/tn, K/tk). K MUST stay the innermost ("arbitrary") grid
    axis: the f32 output tile stays resident in VMEM across the K steps and is
    used directly as the accumulator.

    x_ref: (tm, tk) bf16 activation tile
    w_ref: (tn, tk) bf16 weight tile in PyTorch (out, in) layout
    b_ref: (1, tn)  f32 bias tile
    o_ref: (tm, tn) f32 output tile (accumulator)
    """
    k = pl.program_id(2)

    @pl.when(k == 0)
    def _init():
        # Seed the resident output tile with the bias (no separate scratch,
        # no finalize add).
        o_ref[...] = jnp.broadcast_to(b_ref[...], o_ref.shape).astype(o_ref.dtype)

    # bf16 tiles -> MXU, f32 accumulation. Contract dim 1 of both operands so
    # the PyTorch (out, in) weight layout is consumed without a transpose pass.
    o_ref[...] += lax.dot_general(
        x_ref[...], w_ref[...],
        dimension_numbers=(((1,), (1,)), ((), ())),
        preferred_element_type=jnp.float32,
    ).astype(o_ref.dtype)


# ---- parameter preparation (hoisted, once per model) -------------------------
def prepare_mlp_top_params(weight: jax.Array, bias: jax.Array = None,
                           *, compute_dtype=jnp.bfloat16):
    """Pick N/K tiles, zero-pad the weight to tile multiples and pre-cast it to
    the MXU compute dtype. Do this ONCE at init, not per forward call.

    Returns (w_padded, bias_padded, meta) with meta = (output_dim, input_dim, tn, tk).
    """
    output_dim, input_dim = weight.shape
    tn = _pick_tile(output_dim, _LANE_ALIGN, _TN_MAX, _TN_CANDIDATES)
    tk = _pick_tile(input_dim, _LANE_ALIGN, _TK_MAX, _TK_CANDIDATES)
    n_p = _round_up(output_dim, tn)
    k_p = _round_up(input_dim, tk)

    w_p = weight
    if (n_p, k_p) != (output_dim, input_dim):
        w_p = jnp.pad(weight, ((0, n_p - output_dim), (0, k_p - input_dim)))
    w_p = w_p.astype(compute_dtype)

    if bias is None:
        b_p = jnp.zeros((1, n_p), dtype=jnp.float32)
    else:
        b_p = jnp.pad(bias.reshape(1, output_dim).astype(jnp.float32),
                      ((0, 0), (0, n_p - output_dim)))
    return w_p, b_p, (output_dim, input_dim, tn, tk)


# ---- forward ------------------------------------------------------------------
def mlp_top_forward_prepared(x: jax.Array, w_p: jax.Array, b_p: jax.Array,
                             meta) -> jax.Array:
    """Forward with pre-padded / pre-cast parameters from prepare_mlp_top_params."""
    output_dim, input_dim, tn, tk = meta
    batch = x.shape[0]
    assert x.shape[1] == input_dim, "input feature dim mismatch"
    n_p, k_p = w_p.shape
    compute_dtype = w_p.dtype

    tm = _pick_tile(batch, _SUBLANE_ALIGN, _TM_MAX, _TM_CANDIDATES)
    m_p = _round_up(batch, tm)

    # Megacore: if both parallel axes have a single block, split M so the grid
    # has >= 2 parallel blocks and the second TensorCore (v7x) gets work.
    if (m_p // tm) * (n_p // tn) == 1 and tm % 16 == 0:
        tm //= 2

    x_p = x
    if (m_p, k_p) != (batch, input_dim):
        x_p = jnp.pad(x, ((0, m_p - batch), (0, k_p - input_dim)))
    x_p = x_p.astype(compute_dtype)

    grid = (m_p // tm, n_p // tn, k_p // tk)
    m_blocks, n_blocks, _ = grid

    itemsize = jnp.dtype(compute_dtype).itemsize
    cost = pl.CostEstimate(
        flops=2 * m_p * n_p * k_p,
        transcendentals=0,
        # x panel is re-read once per N block, W panel once per M block.
        bytes_accessed=(itemsize * (m_p * k_p * n_blocks + n_p * k_p * m_blocks)
                        + 4 * (m_p * n_p + n_p)),
    )

    # Double-buffered working set: x/W/bias input tiles + resident f32 out tile.
    vmem_needed = (2 * (tm * tk + tn * tk) * itemsize
                   + 2 * tm * tn * 4 + 2 * tn * 4)
    vmem_limit = int(min(max(2 * vmem_needed, 32 * 1024 * 1024), 48 * 1024 * 1024))

    out_p = pl.pallas_call(
        _mlp_top_kernel,
        out_shape=jax.ShapeDtypeStruct((m_p, n_p), jnp.float32),
        grid_spec=pltpu.PrefetchScalarGridSpec(
            num_scalar_prefetch=0,
            grid=grid,
            in_specs=[
                pl.BlockSpec((tm, tk), lambda i, j, k: (i, k)),   # x   (bf16)
                pl.BlockSpec((tn, tk), lambda i, j, k: (j, k)),   # W   (out, in) bf16
                pl.BlockSpec((1, tn), lambda i, j, k: (0, j)),    # bias (f32)
            ],
            out_specs=pl.BlockSpec((tm, tn), lambda i, j, k: (i, j)),
        ),
        compiler_params=pltpu.CompilerParams(
            # K (axis 2) is the reduction axis and must stay "arbitrary"/innermost.
            dimension_semantics=("parallel", "parallel", "arbitrary"),
            vmem_limit_bytes=vmem_limit,
        ),
        cost_estimate=cost,
    )(x_p, w_p, b_p)

    return out_p[:batch, :output_dim]


def mlp_top_forward(x: jax.Array, weight: jax.Array, bias: jax.Array = None,
                    *, compute_dtype=jnp.bfloat16) -> jax.Array:
    """Convenience one-shot forward: (batch, input_dim) @ (output_dim, input_dim)^T + bias.
    For repeated calls, hoist prepare_mlp_top_params() and call the *_prepared variant."""
    w_p, b_p, meta = prepare_mlp_top_params(weight, bias, compute_dtype=compute_dtype)
    return mlp_top_forward_prepared(x, w_p, b_p, meta)


def init_mlp_top_params(input_dim: int, output_dim: int,
                        init_weights: float = None, seed: int = 0):
    """Deterministic parameter init mirroring MLPTop.__init__:
       - weight: constant `init_weights` if given, else normal(0, 0.01)
         (init_linear_np-style)
       - bias:   zeros (nn.init.zeros_)
    """
    if init_weights is not None:
        weight = jnp.full((output_dim, input_dim), init_weights, dtype=jnp.float32)
    else:
        key = jax.random.PRNGKey(seed)
        weight = 0.01 * jax.random.normal(key, (output_dim, input_dim),
                                          dtype=jnp.float32)
    bias = jnp.zeros((output_dim,), dtype=jnp.float32)
    return weight, bias


# TODO(synk): criterion (BCEWithLogitsLoss / CrossEntropyLoss) and the
# optimizer-driven update_weights() are training-side utilities, not part of
# the forward pass, and are not implemented here.

if __name__ == "__main__":
    def _ref(x, w, b):
        # Reference matching the kernel's numerics: bf16 operands, f32 accumulation.
        return jnp.dot(x.astype(jnp.bfloat16), w.astype(jnp.bfloat16).T,
                       preferred_element_type=jnp.float32) + b

    # --- Small test matching the module's forward (batch, input_dim) -> (batch, output_dim)
    batch, input_dim, output_dim = 8, 32, 8
    key = jax.random.PRNGKey(0)
    kx, _ = jax.random.split(key)
    x = jax.random.normal(kx, (batch, input_dim), dtype=jnp.float32)
    weight, bias = init_mlp_top_params(input_dim, output_dim, init_weights=None, seed=0)

    w_p, b_p, meta = prepare_mlp_top_params(weight, bias)      # hoisted prep
    logits = mlp_top_forward_prepared(x, w_p, b_p, meta)
    jax.block_until_ready(logits)
    assert logits.shape == (batch, output_dim)
    assert jnp.allclose(logits, _ref(x, weight, bias), atol=5e-3, rtol=1e-2), \
        "small-shape mismatch"

    # --- Multi-step K reduction + M tiling (megacore split) path.
    b2, k2, n2 = 256, 1024, 256
    k_a, k_b = jax.random.split(jax.random.PRNGKey(1))
    x2 = jax.random.normal(k_a, (b2, k2), dtype=jnp.float32)
    w2 = 0.01 * jax.random.normal(k_b, (n2, k2), dtype=jnp.float32)
    bias2 = jnp.linspace(-1.0, 1.0, n2, dtype=jnp.float32)
    logits2 = mlp_top_forward(x2, w2, bias2)
    jax.block_until_ready(logits2)
    assert jnp.allclose(logits2, _ref(x2, w2, bias2), atol=5e-3, rtol=1e-2), \
        "tiled-shape mismatch"

    # --- Ragged / unaligned dims (exercise padding + slice-back).
    b3, k3, n3 = 10, 300, 50
    k_c, k_d = jax.random.split(jax.random.PRNGKey(2))
    x3 = jax.random.normal(k_c, (b3, k3), dtype=jnp.float32)
    w3 = 0.02 * jax.random.normal(k_d, (n3, k3), dtype=jnp.float32)
    bias3 = 0.1 * jnp.arange(n3, dtype=jnp.float32)
    logits3 = mlp_top_forward(x3, w3, bias3)
    jax.block_until_ready(logits3)
    assert logits3.shape == (b3, n3)
    assert jnp.allclose(logits3, _ref(x3, w3, bias3), atol=5e-3, rtol=1e-2), \
        "ragged-shape mismatch"

    print("KERNEL_OK")
</pallas_src>

<mosaic_0001>
module attributes {stable_mosaic.version = 11 : i64} {
  func.func @_mlp_top_kernel(%arg0: i32, %arg1: i32, %arg2: i32, %arg3: memref<8x256xbf16, #tpu.memory_space<vmem>>, %arg4: memref<256x256xbf16, #tpu.memory_space<vmem>>, %arg5: memref<1x256xf32, #tpu.memory_space<vmem>>, %arg6: memref<8x256xf32, #tpu.memory_space<vmem>>) attributes {dimension_semantics = [#tpu.dimension_semantics<parallel>, #tpu.dimension_semantics<parallel>, #tpu.dimension_semantics<arbitrary>], iteration_bounds = array<i64: 1, 1, 1>, scalar_prefetch = 0 : i64, scratch_operands = 0 : i64, tpu.core_type = #tpu.core_type<tc>, window_params = [{transform_indices = @transform_0, window_bounds = array<i64: 8, 256>}, {transform_indices = @transform_1, window_bounds = array<i64: 256, 256>}, {transform_indices = @transform_2, window_bounds = array<i64: 1, 256>}, {transform_indices = @transform_3, window_bounds = array<i64: 8, 256>}]} {
    %c0_i32 = arith.constant 0 : i32
    %0 = arith.cmpi eq, %arg2, %c0_i32 : i32
    %1 = arith.extui %0 : i1 to i32
    %c0_i32_0 = arith.constant 0 : i32
    %2 = arith.cmpi ne, %1, %c0_i32_0 : i32
    scf.if %2 {
      %c0_8 = arith.constant 0 : index
      %c0_9 = arith.constant 0 : index
      %9 = vector.load %arg5[%c0_8, %c0_9] : memref<1x256xf32, #tpu.memory_space<vmem>>, vector<1x256xf32>
      %10 = vector.shape_cast %9 : vector<1x256xf32> to vector<1x256xf32>
      %11 = vector.broadcast %10 : vector<1x256xf32> to vector<8x256xf32>
      %c0_10 = arith.constant 0 : index
      %c0_11 = arith.constant 0 : index
      %12 = vector.load %arg6[%c0_10, %c0_11] : memref<8x256xf32, #tpu.memory_space<vmem>>, vector<8x256xf32>
      tpu.vector_store %arg6[%c0_10, %c0_11], %11 {strides = array<i32>} : memref<8x256xf32, #tpu.memory_space<vmem>>, vector<8x256xf32>,
    } else {
    }
    %c0 = arith.constant 0 : index
    %c0_1 = arith.constant 0 : index
    %3 = vector.load %arg6[%c0, %c0_1] : memref<8x256xf32, #tpu.memory_space<vmem>>, vector<8x256xf32>
    %c0_2 = arith.constant 0 : index
    %c0_3 = arith.constant 0 : index
    %4 = vector.load %arg3[%c0_2, %c0_3] : memref<8x256xbf16, #tpu.memory_space<vmem>>, vector<8x256xbf16>
    %c0_4 = arith.constant 0 : index
    %c0_5 = arith.constant 0 : index
    %5 = vector.load %arg4[%c0_4, %c0_5] : memref<256x256xbf16, #tpu.memory_space<vmem>>, vector<256x256xbf16>
    %cst = arith.constant dense<0.000000e+00> : vector<8x256xf32>
    %6 = tpu.matmul %4, %5, %cst {dimension_numbers = #tpu.dot_dimension_numbers<[1], [1], [0], [0], [0, 0, 1, 0], [], []>} : vector<8x256xbf16>, vector<256x256xbf16>, vector<8x256xf32> -> vector<8x256xf32>
    %7 = arith.addf %3, %6 : vector<8x256xf32>
    %c0_6 = arith.constant 0 : index
    %c0_7 = arith.constant 0 : index
    %8 = vector.load %arg6[%c0_6, %c0_7] : memref<8x256xf32, #tpu.memory_space<vmem>>, vector<8x256xf32>
    tpu.vector_store %arg6[%c0_6, %c0_7], %7 {strides = array<i32>} : memref<8x256xf32, #tpu.memory_space<vmem>>, vector<8x256xf32>,
    return
  }
  func.func @transform_0(%arg0: i32, %arg1: i32, %arg2: i32) -> (i32, i32) {
    %c0_i32 = arith.constant 0 : i32
    return %arg0, %arg2 : i32, i32
  }
  func.func @transform_1(%arg0: i32, %arg1: i32, %arg2: i32) -> (i32, i32) {
    %c0_i32 = arith.constant 0 : i32
    return %arg1, %arg2 : i32, i32
  }
  func.func @transform_2(%arg0: i32, %arg1: i32, %arg2: i32) -> (i32, i32) {
    %c0_i32 = arith.constant 0 : i32
    %c0_i32_0 = arith.constant 0 : i32
    return %c0_i32, %arg1 : i32, i32
  }
  func.func @transform_3(%arg0: i32, %arg1: i32, %arg2: i32) -> (i32, i32) {
    %c0_i32 = arith.constant 0 : i32
    return %arg0, %arg1 : i32, i32
  }
}

</mosaic_0001>

<llo_original>
// kernel: tpu_custom_call.1
$region0: #{tpu_custom_call.1}
  #allocation0 [shape = 'u32[]', space=smem, size = 0x4, offset = 0x4, fixed_abs, tag = 'smem constant byte address 0x4 - core index']
  #allocation1 [shape = 'u32[72,128]{1,0:T(1,128)}', space=vmem, size = 0x9000, scoped, tag = 'internal scratch']
  %s0 = inlined_call_operand.hbm [shape: bf16[8,256], index: 0, kind: input, shape index: {}]
  %s1 = inlined_call_operand.hbm [shape: bf16[256,256], index: 1, kind: input, shape index: {}]
  %s2 = inlined_call_operand.hbm [shape: f32[1,256], index: 2, kind: input, shape index: {}]
  %s3 = inlined_call_operand.hbm [shape: f32[8,256], index: 3, kind: output, shape index: {}]
  %s4 = sld [smem:[#allocation0]]
  $region38: #{tpu_custom_call.1} parent=0
    _
  %s6 = ssub.s32 1, %s4
  %s7 = scalar_select 0, %s6, %s4
  $region1: #{tpu_custom_call.1} parent=0
    #allocation2 [shape = 'u8[4096]{0}', space=vmem, size = 0x1000, scoped, tag = 'input window, operand 0, single buffered']
    #allocation3 [shape = 's32[1]{0}', space=sflag, size = 0x4, scoped, tag = 'scoped memory for tpu_custom_call.1']
    #allocation4 [shape = 's32[1]{0}', space=sflag, size = 0x4, scoped, tag = 'scoped memory for tpu_custom_call.1']
    #allocation5 [shape = 'u8[131072]{0}', space=vmem, size = 0x20000, scoped, tag = 'input window, operand 1, single buffered']
    #allocation6 [shape = 's32[1]{0}', space=sflag, size = 0x4, scoped, tag = 'scoped memory for tpu_custom_call.1']
    #allocation7 [shape = 'u8[1024]{0}', space=vmem, size = 0x400, scoped, tag = 'input window, operand 2, single buffered']
    #allocation8 [shape = 'u8[8192]{0}', space=vmem, size = 0x2000, scoped, tag = 'output window, operand 0, single buffered']
    %8 = vsyncpa [#allocation3], 0
    %9 = vsyncpa [#allocation6], 0
    %10 = vsyncpa [#allocation4], 0
    // Predicated region
    $region2: #{tpu_custom_call.1} parent=1 // pred_check
      _
    $region3: #{tpu_custom_call.1} parent=1 // pred_check_branch
      %12 = sbr.rel (0) target = $region5
    $region4: #{tpu_custom_call.1} parent=1 // pred_region
      %14 = vsyncadd [#allocation3], 0
      %s16 = sshll.u32 %s0, 4
      %s17 = int_to_ptr.hbm [resolvable:$true] %s16
      %s18 = sshll.u32 [#allocation2], 4
      %s19 = int_to_ptr.vmem [resolvable:$true] %s18
      %21 = dma.hbm_to_vmem [thread:$0]  %s17, 128, %s19, [#allocation3]
    $region5: #{tpu_custom_call.1} parent=1 // pred_fallthru
      _
    // Predicated region
    $region6: #{tpu_custom_call.1} parent=1 // pred_check
      _
    $region7: #{tpu_custom_call.1} parent=1 // pred_check_branch
      %23 = sbr.rel (0) target = $region9
    $region8: #{tpu_custom_call.1} parent=1 // pred_region
      %25 = vsyncadd [#allocation6], 0
      %s26 = sshll.u32 %s1, 4
      %s27 = int_to_ptr.hbm [resolvable:$true] %s26
      %s28 = sshll.u32 [#allocation5], 4
      %s29 = int_to_ptr.vmem [resolvable:$true] %s28
      %34 = dma.hbm_to_vmem [thread:$0]  %s27, 4096, %s29, [#allocation6], 128, 128, 8
    $region9: #{tpu_custom_call.1} parent=1 // pred_fallthru
      _
    // Predicated region
    $region10: #{tpu_custom_call.1} parent=1 // pred_check
      _
    $region11: #{tpu_custom_call.1} parent=1 // pred_check_branch
      %36 = sbr.rel (0) target = $region13
    $region12: #{tpu_custom_call.1} parent=1 // pred_region
      %38 = vsyncadd [#allocation6], 0
      %s40 = sshll.u32 %s2, 4
      %s41 = int_to_ptr.hbm [resolvable:$true] %s40
      %s42 = sshll.u32 [#allocation7], 4
      %s43 = int_to_ptr.vmem [resolvable:$true] %s42
      %45 = dma.hbm_to_vmem [thread:$0]  %s41, 32, %s43, [#allocation6]
    $region13: #{tpu_custom_call.1} parent=1 // pred_fallthru
      _
    // Predicated region
    $region14: #{tpu_custom_call.1} parent=1 // pred_check
      _
    $region15: #{tpu_custom_call.1} parent=1 // pred_check_branch
      %47 = sbr.rel (0) target = $region17
    $region16: #{tpu_custom_call.1} parent=1 // pred_region
      %49 = dma.done [#allocation3], 128
    $region17: #{tpu_custom_call.1} parent=1 // pred_fallthru
      _
    // Predicated region
    $region18: #{tpu_custom_call.1} parent=1 // pred_check
      _
    $region19: #{tpu_custom_call.1} parent=1 // pred_check_branch
      %51 = sbr.rel (0) target = $region21
    $region20: #{tpu_custom_call.1} parent=1 // pred_region
      %53 = dma.done [#allocation6], 4096
    $region21: #{tpu_custom_call.1} parent=1 // pred_fallthru
      _
    // Predicated region
    $region22: #{tpu_custom_call.1} parent=1 // pred_check
      _
    $region23: #{tpu_custom_call.1} parent=1 // pred_check_branch
      %55 = sbr.rel (0) target = $region25
    $region24: #{tpu_custom_call.1} parent=1 // pred_region
      %57 = dma.done [#allocation6], 32
    $region25: #{tpu_custom_call.1} parent=1 // pred_fallthru
      _
    %p58 = scmp.eq.s32.totalorder 0, 0
    // Predicated region
    $region26: #{tpu_custom_call.1} parent=1 // pred_check
      %p59 = pneg %p58
    $region27: #{tpu_custom_call.1} parent=1 // pred_check_branch
      %61 = sbr.rel (%p59) target = $region29
    $region28: #{tpu_custom_call.1} parent=1 // pred_region
      %v62 = vld [vmem:[#allocation7] sm:$0x3]
      %v64 = vperm.slane %v62, 0
      %v65 = vperm.slane %v62, 1
      %68 = vst [vmem:[#allocation8] sm:$0xff] %v64
      %69 = vst [vmem:[#allocation8 + $0x8] sm:$0xff] %v65
    $region29: #{tpu_custom_call.1} parent=1 // pred_fallthru
      _
    %v70 = vld [vmem:[#allocation8] sm:$0xff]
    %v71 = vld [vmem:[#allocation8 + $0x8] sm:$0xff]
    %v72 = vld [vmem:[#allocation2] sm:$0xff]
    %v73 = vld [vmem:[#allocation5] sm:$0xff]
    %v74 = vld [vmem:[#allocation5 + $0x8] sm:$0xff]
    %v75 = vld [vmem:[#allocation5 + $0x10] sm:$0xff]
    %v76 = vld [vmem:[#allocation5 + $0x18] sm:$0xff]
    %v77 = vld [vmem:[#allocation5 + $0x20] sm:$0xff]
    %v78 = vld [vmem:[#allocation5 + $0x28] sm:$0xff]
    %v79 = vld [vmem:[#allocation5 + $0x30] sm:$0xff]
    %v80 = vld [vmem:[#allocation5 + $0x38] sm:$0xff]
    %v81 = vld [vmem:[#allocation5 + $0x40] sm:$0xff]
    %v82 = vld [vmem:[#allocation5 + $0x48] sm:$0xff]
    %v83 = vld [vmem:[#allocation5 + $0x50] sm:$0xff]
    %v84 = vld [vmem:[#allocation5 + $0x58] sm:$0xff]
    %v85 = vld [vmem:[#allocation5 + $0x60] sm:$0xff]
    %v86 = vld [vmem:[#allocation5 + $0x68] sm:$0xff]
    %v87 = vld [vmem:[#allocation5 + $0x70] sm:$0xff]
    %v88 = vld [vmem:[#allocation5 + $0x78] sm:$0xff]
    %v89 = vld [vmem:[#allocation5 + $0x80] sm:$0xff]
    %v90 = vld [vmem:[#allocation5 + $0x88] sm:$0xff]
    %v91 = vld [vmem:[#allocation5 + $0x90] sm:$0xff]
    %v92 = vld [vmem:[#allocation5 + $0x98] sm:$0xff]
    %v93 = vld [vmem:[#allocation5 + $0xa0] sm:$0xff]
    %v94 = vld [vmem:[#allocation5 + $0xa8] sm:$0xff]
    %v95 = vld [vmem:[#allocation5 + $0xb0] sm:$0xff]
    %v96 = vld [vmem:[#allocation5 + $0xb8] sm:$0xff]
    %v97 = vld [vmem:[#allocation5 + $0xc0] sm:$0xff]
    %v98 = vld [vmem:[#allocation5 + $0xc8] sm:$0xff]
    %v99 = vld [vmem:[#allocation5 + $0xd0] sm:$0xff]
    %v100 = vld [vmem:[#allocation5 + $0xd8] sm:$0xff]
    %v101 = vld [vmem:[#allocation5 + $0xe0] sm:$0xff]
    %v102 = vld [vmem:[#allocation5 + $0xe8] sm:$0xff]
    %v103 = vld [vmem:[#allocation5 + $0xf0] sm:$0xff]
    %v104 = vld [vmem:[#allocation5 + $0xf8] sm:$0xff]
    %v106 = vunpack.c.l.b16 %v72
    %v107 = vunpack.c.h.b16 %v72
    %v108 = vpack.c.b16 %v106, %v106
    %v109 = vpack.c.b16 %v107, %v107
    %v144 = vunpack.c.l.b16 %v73
    %v145 = vunpack.c.h.b16 %v73
    %v146 = vunpack.c.l.b16 %v74
    %v147 = vunpack.c.h.b16 %v74
    %v148 = vunpack.c.l.b16 %v75
    %v149 = vunpack.c.h.b16 %v75
    %v150 = vunpack.c.l.b16 %v76
    %v151 = vunpack.c.h.b16 %v76
    %v152 = vunpack.c.l.b16 %v77
    %v153 = vunpack.c.h.b16 %v77
    %v154 = vunpack.c.l.b16 %v78
    %v155 = vunpack.c.h.b16 %v78
    %v156 = vunpack.c.l.b16 %v79
    %v157 = vunpack.c.h.b16 %v79
    %v158 = vunpack.c.l.b16 %v80
    %v159 = vunpack.c.h.b16 %v80
    %v160 = vunpack.c.l.b16 %v81
    %v161 = vunpack.c.h.b16 %v81
    %v162 = vunpack.c.l.b16 %v82
    %v163 = vunpack.c.h.b16 %v82
    %v164 = vunpack.c.l.b16 %v83
    %v165 = vunpack.c.h.b16 %v83
    %v166 = vunpack.c.l.b16 %v84
    %v167 = vunpack.c.h.b16 %v84
    %v168 = vunpack.c.l.b16 %v85
    %v169 = vunpack.c.h.b16 %v85
    %v170 = vunpack.c.l.b16 %v86
    %v171 = vunpack.c.h.b16 %v86
    %v172 = vunpack.c.l.b16 %v87
    %v173 = vunpack.c.h.b16 %v87
    %v174 = vunpack.c.l.b16 %v88
    %v175 = vunpack.c.h.b16 %v88
    %v176 = vunpack.c.l.b16 %v89
    %v177 = vunpack.c.h.b16 %v89
    %v178 = vunpack.c.l.b16 %v90
    %v179 = vunpack.c.h.b16 %v90
    %v180 = vunpack.c.l.b16 %v91
    %v181 = vunpack.c.h.b16 %v91
    %v182 = vunpack.c.l.b16 %v92
    %v183 = vunpack.c.h.b16 %v92
    %v184 = vunpack.c.l.b16 %v93
    %v185 = vunpack.c.h.b16 %v93
    %v186 = vunpack.c.l.b16 %v94
    %v187 = vunpack.c.h.b16 %v94
    %v188 = vunpack.c.l.b16 %v95
    %v189 = vunpack.c.h.b16 %v95
    %v190 = vunpack.c.l.b16 %v96
    %v191 = vunpack.c.h.b16 %v96
    %v192 = vunpack.c.l.b16 %v97
    %v193 = vunpack.c.h.b16 %v97
    %v194 = vunpack.c.l.b16 %v98
    %v195 = vunpack.c.h.b16 %v98
    %v196 = vunpack.c.l.b16 %v99
    %v197 = vunpack.c.h.b16 %v99
    %v198 = vunpack.c.l.b16 %v100
    %v199 = vunpack.c.h.b16 %v100
    %v200 = vunpack.c.l.b16 %v101
    %v201 = vunpack.c.h.b16 %v101
    %v202 = vunpack.c.l.b16 %v102
    %v203 = vunpack.c.h.b16 %v102
    %v204 = vunpack.c.l.b16 %v103
    %v205 = vunpack.c.h.b16 %v103
    %v206 = vunpack.c.l.b16 %v104
    %v207 = vunpack.c.h.b16 %v104
    %v208 = vpack.c.b16 %v146, %v144
    %v209 = vpack.c.b16 %v147, %v145
    %v210 = vpack.c.b16 %v150, %v148
    %v211 = vpack.c.b16 %v151, %v149
    %v212 = vpack.c.b16 %v154, %v152
    %v213 = vpack.c.b16 %v155, %v153
    %v214 = vpack.c.b16 %v158, %v156
    %v215 = vpack.c.b16 %v159, %v157
    %v216 = vpack.c.b16 %v162, %v160
    %v217 = vpack.c.b16 %v163, %v161
    %v218 = vpack.c.b16 %v166, %v164
    %v219 = vpack.c.b16 %v167, %v165
    %v220 = vpack.c.b16 %v170, %v168
    %v221 = vpack.c.b16 %v171, %v169
    %v222 = vpack.c.b16 %v174, %v172
    %v223 = vpack.c.b16 %v175, %v173
    %v224 = vpack.c.b16 %v178, %v176
    %v225 = vpack.c.b16 %v179, %v177
    %v226 = vpack.c.b16 %v182, %v180
    %v227 = vpack.c.b16 %v183, %v181
    %v228 = vpack.c.b16 %v186, %v184
    %v229 = vpack.c.b16 %v187, %v185
    %v230 = vpack.c.b16 %v190, %v188
    %v231 = vpack.c.b16 %v191, %v189
    %v232 = vpack.c.b16 %v194, %v192
    %v233 = vpack.c.b16 %v195, %v193
    %v234 = vpack.c.b16 %v198, %v196
    %v235 = vpack.c.b16 %v199, %v197
    %v236 = vpack.c.b16 %v202, %v200
    %v237 = vpack.c.b16 %v203, %v201
    %v238 = vpack.c.b16 %v206, %v204
    %v239 = vpack.c.b16 %v207, %v205
    %272 = vmatpush.bf16.xpose.msra.mxu0 %v222
    %273 = vmatpush.bf16.xpose.msra.mxu0 %v220
    %274 = vmatpush.bf16.xpose.msra.mxu0 %v218
    %275 = vmatpush.bf16.xpose.msra.mxu0 %v216
    %276 = vmatpush.bf16.xpose.msra.mxu0 %v214
    %277 = vmatpush.bf16.xpose.msra.mxu0 %v212
    %278 = vmatpush.bf16.xpose.msra.mxu0 %v210
    %279 = vmatpush.bf16.xpose.msra.mxu0 %v208
    %280 = vmatmul.bf16.gmra.mxu0 %v108
    %v281 = vpop.f32.mrf.mxu0
    %v282 = vadd.f32 0.0, %v281
    %v283 = vpop.f32.mrf.mxu0
    %284 = vdwg.mxu0
    %285 = vmatpush.bf16.xpose.msra.mxu0 %v223
    %286 = vmatpush.bf16.xpose.msra.mxu0 %v221
    %287 = vmatpush.bf16.xpose.msra.mxu0 %v219
    %288 = vmatpush.bf16.xpose.msra.mxu0 %v217
    %289 = vmatpush.bf16.xpose.msra.mxu0 %v215
    %290 = vmatpush.bf16.xpose.msra.mxu0 %v213
    %291 = vmatpush.bf16.xpose.msra.mxu0 %v211
    %292 = vmatpush.bf16.xpose.msra.mxu0 %v209
    %293 = vmatmul.bf16.gmra.mxu0 %v109
    %v294 = vpop.f32.mrf.mxu0
    %v295 = vadd.f32 %v282, %v294
    %v296 = vpop.f32.mrf.mxu0
    %297 = vdwg.mxu0
    %298 = vmatpush.bf16.xpose.msra.mxu0 %v238
    %299 = vmatpush.bf16.xpose.msra.mxu0 %v236
    %300 = vmatpush.bf16.xpose.msra.mxu0 %v234
    %301 = vmatpush.bf16.xpose.msra.mxu0 %v232
    %302 = vmatpush.bf16.xpose.msra.mxu0 %v230
    %303 = vmatpush.bf16.xpose.msra.mxu0 %v228
    %304 = vmatpush.bf16.xpose.msra.mxu0 %v226
    %305 = vmatpush.bf16.xpose.msra.mxu0 %v224
    %306 = vmatmul.bf16.gmra.mxu0 %v108
    %v307 = vpop.f32.mrf.mxu0
    %v308 = vadd.f32 0.0, %v307
    %v309 = vpop.f32.mrf.mxu0
    %310 = vdwg.mxu0
    %311 = vmatpush.bf16.xpose.msra.mxu0 %v239
    %312 = vmatpush.bf16.xpose.msra.mxu0 %v237
    %313 = vmatpush.bf16.xpose.msra.mxu0 %v235
    %314 = vmatpush.bf16.xpose.msra.mxu0 %v233
    %315 = vmatpush.bf16.xpose.msra.mxu0 %v231
    %316 = vmatpush.bf16.xpose.msra.mxu0 %v229
    %317 = vmatpush.bf16.xpose.msra.mxu0 %v227
    %318 = vmatpush.bf16.xpose.msra.mxu0 %v225
    %319 = vmatmul.bf16.gmra.mxu0 %v109
    %v320 = vpop.f32.mrf.mxu0
    %v321 = vadd.f32 %v308, %v320
    %v322 = vpop.f32.mrf.mxu0
    %323 = vdwg.mxu0
    %v324 = vadd.f32 %v70, %v295
    %v325 = vadd.f32 %v71, %v321
    %326 = vst [vmem:[#allocation8] sm:$0xff] %v324
    %327 = vst [vmem:[#allocation8 + $0x8] sm:$0xff] %v325
    // Predicated region
    $region30: #{tpu_custom_call.1} parent=1 // pred_check
      _
    $region31: #{tpu_custom_call.1} parent=1 // pred_check_branch
      %329 = sbr.rel (0) target = $region33
    $region32: #{tpu_custom_call.1} parent=1 // pred_region
      %331 = vsyncadd [#allocation4], 0
      %s333 = sshll.u32 [#allocation8], 4
      %s334 = int_to_ptr.vmem [resolvable:$true] %s333
      %s335 = sshll.u32 %s3, 4
      %s336 = int_to_ptr.hbm [resolvable:$true] %s335
      %338 = dma.vmem_to_hbm [thread:$0]  %s334, 256, %s336, [#allocation4]
    $region33: #{tpu_custom_call.1} parent=1 // pred_fallthru
      _
    // Predicated region
    $region34: #{tpu_custom_call.1} parent=1 // pred_check
      _
    $region35: #{tpu_custom_call.1} parent=1 // pred_check_branch
      %340 = sbr.rel (0) target = $region37
    $region36: #{tpu_custom_call.1} parent=1 // pred_region
      %342 = dma.done [#allocation4], 256
    $region37: #{tpu_custom_call.1} parent=1 // pred_fallthru
      _
    %343 = vsyncpa [#allocation3], 1
    %344 = vsyncpa [#allocation6], 1
    %345 = vsyncpa [#allocation4], 1

</llo_original>
